<compile_context>
chip_gen: v6e
topology: v6e:2x2x1
jax: 0.10.0
libtpu: 0.0.40
codegen_flags: <defaults>
</compile_context>

<pallas_src>
import jax
import jax.numpy as jnp
import numpy as np
from jax.experimental import pallas as pl
from jax.experimental.pallas import tpu as pltpu

LANE = 128  # TPU lane width


def _round_up(n, m):
    return ((n + m - 1) // m) * m


def _nbytes(shape, dtype):
    n = 1
    for s in shape:
        n *= int(s)
    return n * np.dtype(dtype).itemsize


def _leaky_relu(x, negative_slope=0.2):
    return jnp.where(x >= 0, x, negative_slope * x)


def discriminator_kernel(x_ref, w1_ref, w2_ref, vec_ref, b3_ref, o_ref):
    """Fused 3-layer MLP over one batch tile.

    x_ref:   (TB, D)      f32  (cast to the compute dtype in-kernel)
    w1_ref:  (D, Hp)      bf16/f32, VMEM-resident across the grid
    w2_ref:  (Hp, Hp)     bf16/f32, VMEM-resident
    vec_ref: (3, Hp)      f32: row0 = b1, row1 = b2, row2 = w3 (final weights)
    b3_ref:  (1,)         f32 scalar in SMEM
    o_ref:   (1, TB)      f32: lane-major scores for this tile
    """
    cdt = w1_ref.dtype
    x = x_ref[...].astype(cdt)                 # bf16 cast in-kernel (no wrapper pass)

    b1 = vec_ref[0:1, :]                       # (1, Hp) f32
    b2 = vec_ref[1:2, :]                       # (1, Hp) f32
    w3 = vec_ref[2:3, :]                       # (1, Hp) f32

    # Layer 1: MXU matmul (f32 accumulation) + f32 bias / LeakyReLU epilogue.
    h1 = jnp.dot(x, w1_ref[...], preferred_element_type=jnp.float32)
    h1 = _leaky_relu(h1 + b1)                  # (TB, Hp) f32

    # Layer 2.
    h2 = jnp.dot(h1.astype(cdt), w2_ref[...], preferred_element_type=jnp.float32)
    h2 = _leaky_relu(h2 + b2)                  # (TB, Hp) f32

    # Layer 3 (out_features == 1), produced lane-major:
    #   score_t[0, t] = sum_h w3[h] * h2[t, h]
    # h2 is (8,128)-aligned, so h2.T is a cheap, fully supported XLU transpose;
    # the (1,Hp) x (Hp,TB) matmul rides MXU slack.  The (1, TB) result is a
    # single contiguous full-width store (no 128-lane broadcast, no
    # sublane-strided (TB,1) column DMA).
    score_t = jnp.dot(w3, h2.T, preferred_element_type=jnp.float32)   # (1, TB)
    o_ref[...] = (score_t + b3_ref[0]).astype(o_ref.dtype)


def discriminator_forward(x, params, *, block_batch=1024, use_bf16=True):
    """Batch-tiled, VMEM-resident-weight forward pass.

    x: (batch, input_dim) f32.  params: (w1, b1, w2, b2, w3, b3) with
    w: (in_features, out_features), b: (out_features,)  (same math as PyTorch's
    x @ W.T + b since PyTorch stores W as (out, in)).
    Returns (batch, 1) f32 scores.
    """
    w1, b1, w2, b2, w3, b3 = params
    batch, input_dim = x.shape
    hidden_dim = w1.shape[1]
    h_pad = _round_up(hidden_dim, LANE)
    cdt = jnp.bfloat16 if use_bf16 else jnp.float32

    # ---- batch tile size ----------------------------------------------------
    tb = min(block_batch, _round_up(batch, 16))
    if batch >= 32:
        # At least two balanced tiles so the "parallel" axis can span both
        # TensorCores on v7x (harmless on single-core v5e/v6e).
        tb = min(tb, _round_up(pl.cdiv(batch, 2), 16))
    tb = max(8, min(tb, _round_up(batch, 8)))   # always a multiple of 8
    num_tiles = pl.cdiv(batch, tb)

    # ---- small weight-only prep (x itself is passed through untouched) ------
    def pad2(a, rows, cols):
        if a.shape == (rows, cols):
            return a
        return jnp.zeros((rows, cols), a.dtype).at[:a.shape[0], :a.shape[1]].set(a)

    w1p = pad2(w1, input_dim, h_pad).astype(cdt)    # pad hidden (N) dim only
    w2p = pad2(w2, h_pad, h_pad).astype(cdt)
    vec = jnp.zeros((3, h_pad), jnp.float32)
    vec = vec.at[0, :hidden_dim].set(b1.astype(jnp.float32))
    vec = vec.at[1, :hidden_dim].set(b2.astype(jnp.float32))
    vec = vec.at[2, :hidden_dim].set(w3[:, 0].astype(jnp.float32))
    b3s = b3.reshape((1,)).astype(jnp.float32)

    # ---- VMEM budget from actual sizes (double-buffered blocks + residents) -
    vmem_needed = (
        2 * (_nbytes((tb, input_dim), x.dtype) + _nbytes((1, tb), jnp.float32))
        + 2 * (_nbytes((input_dim, h_pad), cdt) + _nbytes((h_pad, h_pad), cdt)
               + _nbytes((3, h_pad), jnp.float32))
        + 4 * tb * h_pad * 4          # h1/h2 f32 working set + spill headroom
        + (4 << 20))                  # margin
    vmem_limit = int(min(max(vmem_needed, 16 << 20), 64 << 20))  # v7x-safe cap

    out = pl.pallas_call(
        discriminator_kernel,
        out_shape=jax.ShapeDtypeStruct((num_tiles, 1, tb), jnp.float32),
        grid=(num_tiles,),
        in_specs=[
            pl.BlockSpec((tb, input_dim), lambda i: (i, 0)),      # x: batch-tiled
            pl.BlockSpec((input_dim, h_pad), lambda i: (0, 0)),   # w1: resident
            pl.BlockSpec((h_pad, h_pad), lambda i: (0, 0)),       # w2: resident
            pl.BlockSpec((3, h_pad), lambda i: (0, 0)),           # b1/b2/w3: resident
            pl.BlockSpec(memory_space=pltpu.MemorySpace.SMEM),    # b3 scalar
        ],
        out_specs=pl.BlockSpec((None, 1, tb), lambda i: (i, 0, 0)),  # lane-major row
        compiler_params=pltpu.CompilerParams(
            dimension_semantics=("parallel",),   # independent batch tiles
            vmem_limit_bytes=vmem_limit,
        ),
    )(x, w1p, w2p, vec, b3s)

    # (num_tiles, 1, tb) -> (batch, 1); tiny (4 B/row) trim of any edge padding.
    return out.reshape(num_tiles * tb, 1)[:batch]


def init_params(key, input_dim, hidden_dim):
    """PyTorch-style init: U(-1/sqrt(fan_in), 1/sqrt(fan_in))."""
    ks = jax.random.split(key, 6)

    def linear(kw, kb, fan_in, fan_out):
        bound = 1.0 / jnp.sqrt(jnp.float32(fan_in))
        w = jax.random.uniform(kw, (fan_in, fan_out), jnp.float32, -bound, bound)
        b = jax.random.uniform(kb, (fan_out,), jnp.float32, -bound, bound)
        return w, b

    w1, b1 = linear(ks[0], ks[1], input_dim, hidden_dim)
    w2, b2 = linear(ks[2], ks[3], hidden_dim, hidden_dim)
    w3, b3 = linear(ks[4], ks[5], hidden_dim, 1)
    return (w1, b1, w2, b2, w3, b3)


def reference_forward(x, params, use_bf16=True):
    """JAX reference emulating the kernel's mixed precision (bf16 matmul
    operands, f32 accumulation / epilogue, f32 final layer)."""
    w1, b1, w2, b2, w3, b3 = params
    cdt = jnp.bfloat16 if use_bf16 else jnp.float32

    def mm(a, w):
        return jnp.dot(a.astype(cdt), w.astype(cdt),
                       preferred_element_type=jnp.float32)

    h1 = _leaky_relu(mm(x, w1) + b1)
    h2 = _leaky_relu(mm(h1, w2) + b2)
    return jnp.sum(h2 * w3[:, 0], axis=-1, keepdims=True) + b3


def reference_forward_f32(x, params):
    """Pure-f32 reference (matches the PyTorch module)."""
    w1, b1, w2, b2, w3, b3 = params
    h1 = _leaky_relu(x @ w1 + b1)
    h2 = _leaky_relu(h1 @ w2 + b2)
    return h2 @ w3 + b3


if __name__ == "__main__":
    key = jax.random.PRNGKey(0)
    kx, kp, kx2 = jax.random.split(key, 3)

    # Case 1: tiny shapes implied by the module (single exact-fit batch tile).
    batch, input_dim, hidden_dim = 8, 16, 32
    x = jax.random.normal(kx, (batch, input_dim), jnp.float32)
    params = init_params(kp, input_dim, hidden_dim)

    out = jax.block_until_ready(discriminator_forward(x, params))
    assert out.shape == (batch, 1)

    ref_mixed = reference_forward(x, params, use_bf16=True)
    assert jnp.allclose(out, ref_mixed, atol=2e-3, rtol=2e-3), \
        "mismatch vs mixed-precision reference"

    ref_f32 = reference_forward_f32(x, params)
    assert jnp.allclose(out, ref_f32, atol=5e-2, rtol=5e-2), \
        "mismatch vs f32 reference"

    # Case 2: ragged batch exercising the multi-tile grid + partial edge block.
    batch2 = 40
    x2 = jax.random.normal(kx2, (batch2, input_dim), jnp.float32)
    out2 = jax.block_until_ready(discriminator_forward(x2, params))
    assert out2.shape == (batch2, 1)
    assert jnp.allclose(out2, reference_forward(x2, params, use_bf16=True),
                        atol=2e-3, rtol=2e-3), "mismatch (multi-tile case)"

    print("KERNEL_OK")
</pallas_src>

<mosaic_0001>
module attributes {stable_mosaic.version = 11 : i64} {
  func.func @discriminator_kernel(%arg0: i32, %arg1: memref<8x16xf32, #tpu.memory_space<vmem>>, %arg2: memref<16x128xbf16, #tpu.memory_space<vmem>>, %arg3: memref<128x128xbf16, #tpu.memory_space<vmem>>, %arg4: memref<3x128xf32, #tpu.memory_space<vmem>>, %arg5: memref<1xf32, #tpu.memory_space<smem>>, %arg6: memref<1x1x8xf32, #tpu.memory_space<vmem>>) attributes {dimension_semantics = [#tpu.dimension_semantics<parallel>], iteration_bounds = array<i64: 1>, scalar_prefetch = 0 : i64, scratch_operands = 0 : i64, tpu.core_type = #tpu.core_type<tc>, window_params = [{transform_indices = @transform_0, window_bounds = array<i64: 8, 16>}, {pipeline_mode = #tpu.pipeline_mode<synchronous>, transform_indices = @transform_1, window_bounds = array<i64: 16, 128>}, {pipeline_mode = #tpu.pipeline_mode<synchronous>, transform_indices = @transform_2, window_bounds = array<i64: 128, 128>}, {pipeline_mode = #tpu.pipeline_mode<synchronous>, transform_indices = @transform_3, window_bounds = array<i64: 3, 128>}, {transform_indices = @transform_4, window_bounds = array<i64: 1>}, {transform_indices = @transform_5, window_bounds = array<i64: 1, 1, 8>}]} {
    %c0 = arith.constant 0 : index
    %c0_0 = arith.constant 0 : index
    %0 = vector.load %arg1[%c0, %c0_0] : memref<8x16xf32, #tpu.memory_space<vmem>>, vector<8x16xf32>
    %1 = arith.truncf %0 : vector<8x16xf32> to vector<8x16xbf16>
    %c0_1 = arith.constant 0 : index
    %c0_2 = arith.constant 0 : index
    %2 = vector.load %arg4[%c0_1, %c0_2] : memref<3x128xf32, #tpu.memory_space<vmem>>, vector<1x128xf32>
    %c1 = arith.constant 1 : index
    %c0_3 = arith.constant 0 : index
    %3 = vector.load %arg4[%c1, %c0_3] : memref<3x128xf32, #tpu.memory_space<vmem>>, vector<1x128xf32>
    %c2 = arith.constant 2 : index
    %c0_4 = arith.constant 0 : index
    %4 = vector.load %arg4[%c2, %c0_4] : memref<3x128xf32, #tpu.memory_space<vmem>>, vector<1x128xf32>
    %c0_5 = arith.constant 0 : index
    %c0_6 = arith.constant 0 : index
    %5 = vector.load %arg2[%c0_5, %c0_6] : memref<16x128xbf16, #tpu.memory_space<vmem>>, vector<16x128xbf16>
    %cst = arith.constant dense<0.000000e+00> : vector<8x128xf32>
    %6 = tpu.matmul %1, %5, %cst {dimension_numbers = #tpu.dot_dimension_numbers<[1], [0], [0], [1], [0, 0, 1, 1], [], []>} : vector<8x16xbf16>, vector<16x128xbf16>, vector<8x128xf32> -> vector<8x128xf32>
    %7 = vector.broadcast %2 : vector<1x128xf32> to vector<8x128xf32>
    %8 = arith.addf %6, %7 : vector<8x128xf32>
    %cst_7 = arith.constant 0.000000e+00 : f32
    %9 = vector.broadcast %cst_7 : f32 to vector<8x128xf32>
    %10 = arith.cmpf oge, %8, %9 : vector<8x128xf32>
    %cst_8 = arith.constant 2.000000e-01 : f32
    %11 = vector.broadcast %cst_8 : f32 to vector<8x128xf32>
    %12 = arith.mulf %11, %8 : vector<8x128xf32>
    %13 = arith.select %10, %8, %12 : vector<8x128xi1>, vector<8x128xf32>
    %14 = arith.truncf %13 : vector<8x128xf32> to vector<8x128xbf16>
    %c0_9 = arith.constant 0 : index
    %c0_10 = arith.constant 0 : index
    %15 = vector.load %arg3[%c0_9, %c0_10] : memref<128x128xbf16, #tpu.memory_space<vmem>>, vector<128x128xbf16>
    %cst_11 = arith.constant dense<0.000000e+00> : vector<8x128xf32>
    %16 = tpu.matmul %14, %15, %cst_11 {dimension_numbers = #tpu.dot_dimension_numbers<[1], [0], [0], [1], [0, 0, 1, 1], [], []>} : vector<8x128xbf16>, vector<128x128xbf16>, vector<8x128xf32> -> vector<8x128xf32>
    %17 = vector.broadcast %3 : vector<1x128xf32> to vector<8x128xf32>
    %18 = arith.addf %16, %17 : vector<8x128xf32>
    %cst_12 = arith.constant 0.000000e+00 : f32
    %19 = vector.broadcast %cst_12 : f32 to vector<8x128xf32>
    %20 = arith.cmpf oge, %18, %19 : vector<8x128xf32>
    %cst_13 = arith.constant 2.000000e-01 : f32
    %21 = vector.broadcast %cst_13 : f32 to vector<8x128xf32>
    %22 = arith.mulf %21, %18 : vector<8x128xf32>
    %23 = arith.select %20, %18, %22 : vector<8x128xi1>, vector<8x128xf32>
    %24 = tpu.transpose %23, [1, 0] : vector<8x128xf32> -> vector<128x8xf32>
    %cst_14 = arith.constant dense<0.000000e+00> : vector<1x8xf32>
    %25 = tpu.matmul %4, %24, %cst_14 {dimension_numbers = #tpu.dot_dimension_numbers<[1], [0], [0], [1], [0, 0, 1, 1], [], []>} : vector<1x128xf32>, vector<128x8xf32>, vector<1x8xf32> -> vector<1x8xf32>
    %c0_15 = arith.constant 0 : index
    %26 = memref.load %arg5[%c0_15] : memref<1xf32, #tpu.memory_space<smem>>
    %27 = vector.broadcast %26 : f32 to vector<1x8xf32>
    %28 = arith.addf %25, %27 : vector<1x8xf32>
    %c0_16 = arith.constant 0 : index
    %c0_17 = arith.constant 0 : index
    %c0_18 = arith.constant 0 : index
    %29 = vector.load %arg6[%c0_16, %c0_17, %c0_18] : memref<1x1x8xf32, #tpu.memory_space<vmem>>, vector<1x1x8xf32>
    %30 = vector.shape_cast %29 : vector<1x1x8xf32> to vector<1x8xf32>
    %31 = vector.shape_cast %28 : vector<1x8xf32> to vector<1x1x8xf32>
    tpu.vector_store %arg6[%c0_16, %c0_17, %c0_18], %31 {strides = array<i32>} : memref<1x1x8xf32, #tpu.memory_space<vmem>>, vector<1x1x8xf32>,
    return
  }
  func.func @transform_0(%arg0: i32) -> (i32, i32) {
    %c0_i32 = arith.constant 0 : i32
    %c0_i32_0 = arith.constant 0 : i32
    return %arg0, %c0_i32 : i32, i32
  }
  func.func @transform_1(%arg0: i32) -> (i32, i32) {
    %c0_i32 = arith.constant 0 : i32
    %c0_i32_0 = arith.constant 0 : i32
    %c0_i32_1 = arith.constant 0 : i32
    return %c0_i32, %c0_i32_0 : i32, i32
  }
  func.func @transform_2(%arg0: i32) -> (i32, i32) {
    %c0_i32 = arith.constant 0 : i32
    %c0_i32_0 = arith.constant 0 : i32
    %c0_i32_1 = arith.constant 0 : i32
    return %c0_i32, %c0_i32_0 : i32, i32
  }
  func.func @transform_3(%arg0: i32) -> (i32, i32) {
    %c0_i32 = arith.constant 0 : i32
    %c0_i32_0 = arith.constant 0 : i32
    %c0_i32_1 = arith.constant 0 : i32
    return %c0_i32, %c0_i32_0 : i32, i32
  }
  func.func @transform_4(%arg0: i32) -> i32 {
    %c0_i32 = arith.constant 0 : i32
    %c0_i32_0 = arith.constant 0 : i32
    return %c0_i32 : i32
  }
  func.func @transform_5(%arg0: i32) -> (i32, i32, i32) {
    %c0_i32 = arith.constant 0 : i32
    %c0_i32_0 = arith.constant 0 : i32
    %c0_i32_1 = arith.constant 0 : i32
    return %arg0, %c0_i32, %c0_i32_0 : i32, i32, i32
  }
}

</mosaic_0001>

<llo_original>
// kernel: tpu_custom_call.1
$region0: #{tpu_custom_call.1}
  #allocation0 [shape = 'u32[]', space=smem, size = 0x4, offset = 0x4, fixed_abs, tag = 'smem constant byte address 0x4 - core index']
  #allocation1 [shape = 'u32[144,128]{1,0:T(1,128)}', space=vmem, size = 0x12000, scoped, tag = 'internal scratch']
  #allocation2 [shape = 'f32[1]{0:T(128)S(6)}', space=smem, size = 0x200, scoped, tag = 'scoped memory for tpu_custom_call.1']
  %s0 = inlined_call_operand.hbm [shape: f32[8,16], index: 0, kind: input, shape index: {}]
  %s1 = inlined_call_operand.hbm [shape: bf16[16,128], index: 1, kind: input, shape index: {}]
  %s2 = inlined_call_operand.hbm [shape: bf16[128,128], index: 2, kind: input, shape index: {}]
  %s3 = inlined_call_operand.vmem [shape: f32[3,128], index: 3, kind: input, shape index: {}]
  %s4 = inlined_call_operand.<no memory space> [shape: f32[1], index: 4, kind: input, shape index: {}]
  %s5 = inlined_call_operand.hbm [shape: f32[1,1,8], index: 5, kind: output, shape index: {}]
  %s6 = sld [smem:[#allocation0]]
  $region42: #{tpu_custom_call.1} parent=0
    _
  %s8 = ssub.s32 1, %s6
  %s9 = scalar_select 0, %s8, %s6
  %10 = sst [smem:[#allocation2]] %s4
  $region1: #{tpu_custom_call.1} parent=0
    #allocation3 [shape = 'u8[4096]{0}', space=vmem, size = 0x1000, scoped, tag = 'input window, operand 0, single buffered']
    #allocation4 [shape = 's32[1]{0}', space=sflag, size = 0x4, scoped, tag = 'scoped memory for tpu_custom_call.1']
    #allocation5 [shape = 's32[1]{0}', space=sflag, size = 0x4, scoped, tag = 'scoped memory for tpu_custom_call.1']
    #allocation6 [shape = 'u8[4096]{0}', space=vmem, size = 0x1000, scoped, tag = 'input window, operand 1, single buffered']
    #allocation7 [shape = 's32[1]{0}', space=sflag, size = 0x4, scoped, tag = 'scoped memory for tpu_custom_call.1']
    #allocation8 [shape = 'u8[32768]{0}', space=vmem, size = 0x8000, scoped, tag = 'input window, operand 2, single buffered']
    #allocation9 [shape = 'u8[512]{0}', space=vmem, size = 0x400, scoped, tag = 'output window, operand 0, single buffered']
    %11 = vsyncpa [#allocation4], 0
    %12 = vsyncpa [#allocation7], 0
    %13 = vsyncpa [#allocation5], 0
    // Predicated region
    $region2: #{tpu_custom_call.1} parent=1 // pred_check
      _
    $region3: #{tpu_custom_call.1} parent=1 // pred_check_branch
      %15 = sbr.rel (0) target = $region5
    $region4: #{tpu_custom_call.1} parent=1 // pred_region
      %s17 = ssub.s32 128, 128
      %18 = vsyncadd [#allocation4], %s17
      %s20 = sshll.u32 [#allocation3], 4
      %s21 = int_to_ptr.vmem [resolvable:$true] %s20
      %23 = dma.hbm_to_vmem [thread:$0]  %s0, 128, %s21, [#allocation4]
    $region5: #{tpu_custom_call.1} parent=1 // pred_fallthru
      _
    // Predicated region
    $region6: #{tpu_custom_call.1} parent=1 // pred_check
      _
    $region7: #{tpu_custom_call.1} parent=1 // pred_check_branch
      %25 = sbr.rel (0) target = $region9
    $region8: #{tpu_custom_call.1} parent=1 // pred_region
      %s27 = ssub.s32 128, 128
      %28 = vsyncadd [#allocation7], %s27
      %s29 = sshll.u32 [#allocation6], 4
      %s30 = int_to_ptr.vmem [resolvable:$true] %s29
      %35 = dma.hbm_to_vmem [thread:$0]  %s1, 128, %s30, [#allocation7], 64, 64, 4
    $region9: #{tpu_custom_call.1} parent=1 // pred_fallthru
      _
    // Predicated region
    $region10: #{tpu_custom_call.1} parent=1 // pred_check
      _
    $region11: #{tpu_custom_call.1} parent=1 // pred_check_branch
      %37 = sbr.rel (0) target = $region13
    $region12: #{tpu_custom_call.1} parent=1 // pred_region
      %s39 = ssub.s32 1024, 1024
      %40 = vsyncadd [#allocation7], %s39
      %s41 = sshll.u32 [#allocation8], 4
      %s42 = int_to_ptr.vmem [resolvable:$true] %s41
      %47 = dma.hbm_to_vmem [thread:$0]  %s2, 1024, %s42, [#allocation7], 64, 64, 4
    $region13: #{tpu_custom_call.1} parent=1 // pred_fallthru
      _
    // Predicated region
    $region14: #{tpu_custom_call.1} parent=1 // pred_check
      _
    $region15: #{tpu_custom_call.1} parent=1 // pred_check_branch
      %49 = sbr.rel (0) target = $region17
    $region16: #{tpu_custom_call.1} parent=1 // pred_region
      _
    $region17: #{tpu_custom_call.1} parent=1 // pred_fallthru
      _
    // Predicated region
    $region18: #{tpu_custom_call.1} parent=1 // pred_check
      _
    $region19: #{tpu_custom_call.1} parent=1 // pred_check_branch
      %51 = sbr.rel (0) target = $region21
    $region20: #{tpu_custom_call.1} parent=1 // pred_region
      _
    $region21: #{tpu_custom_call.1} parent=1 // pred_fallthru
      _
    // Predicated region
    $region22: #{tpu_custom_call.1} parent=1 // pred_check
      _
    $region23: #{tpu_custom_call.1} parent=1 // pred_check_branch
      %53 = sbr.rel (0) target = $region25
    $region24: #{tpu_custom_call.1} parent=1 // pred_region
      %54 = dma.done [#allocation4], 128
    $region25: #{tpu_custom_call.1} parent=1 // pred_fallthru
      _
    // Predicated region
    $region26: #{tpu_custom_call.1} parent=1 // pred_check
      _
    $region27: #{tpu_custom_call.1} parent=1 // pred_check_branch
      %56 = sbr.rel (0) target = $region29
    $region28: #{tpu_custom_call.1} parent=1 // pred_region
      %57 = dma.done [#allocation7], 128
    $region29: #{tpu_custom_call.1} parent=1 // pred_fallthru
      _
    // Predicated region
    $region30: #{tpu_custom_call.1} parent=1 // pred_check
      _
    $region31: #{tpu_custom_call.1} parent=1 // pred_check_branch
      %59 = sbr.rel (0) target = $region33
    $region32: #{tpu_custom_call.1} parent=1 // pred_region
      %60 = dma.done [#allocation7], 1024
    $region33: #{tpu_custom_call.1} parent=1 // pred_fallthru
      _
    %v62 = vld [vmem:[#allocation3] sm:$0xff]
    %v63 = vpack.c.bf16 %v62, %v62
    %v64 = vld [vmem:[%s3] sm:$0x1]
    %v65 = vld [vmem:[%s3 + $0x1] sm:$0x1]
    %v66 = vld [vmem:[%s3 + $0x2] sm:$0x1]
    %v67 = vld [vmem:[#allocation6] sm:$0xf]
    %v68 = vld [vmem:[#allocation6 + $0x4] sm:$0xf]
    %v69 = vlaneseq
    %v70 = vshrl.u32 %v69, 7
    %v71 = vsub.s32 0, %v70
    %v72 = vrot.slane %v64, %v71
    %v75 = vunpack.c.l.b16 %v67
    %v76 = vunpack.c.l.b16 %v68
    %v77 = vpack.c.b16 %v76, %v75
    %vm79 = vcmask 130048
    %v81 = vsel %vm79, %v63, 0
    %83 = vmatprep.subr.bf16.mxu0 0
    %84 = vmatpush1.bf16.msra.mxu0 0
    %85 = vmatprep.subr.bf16.mxu0 0
    %86 = vmatpush1.bf16.msra.mxu0 0
    %87 = vmatprep.subr.bf16.mxu0 0
    %88 = vmatpush1.bf16.msra.mxu0 0
    %89 = vmatprep.subr.bf16.mxu0 0
    %90 = vmatpush1.bf16.msra.mxu0 0
    %91 = vmatprep.subr.bf16.mxu0 0
    %92 = vmatpush1.bf16.msra.mxu0 0
    %93 = vmatprep.subr.bf16.mxu0 0
    %94 = vmatpush1.bf16.msra.mxu0 0
    %95 = vmatprep.subr.bf16.mxu0 0
    %96 = vmatpush1.bf16.msra.mxu0 0
    %97 = vmatprep.subr.bf16.mxu0 0
    %98 = vmatpush1.bf16.msra.mxu0 %v77
    %99 = vmatprep.subr.bf16.mxu0 0
    %100 = vmatpush2.bf16.msra.mxu0 0
    %101 = vmatprep.subr.bf16.mxu0 0
    %102 = vmatpush2.bf16.msra.mxu0 0
    %103 = vmatprep.subr.bf16.mxu0 0
    %104 = vmatpush2.bf16.msra.mxu0 0
    %105 = vmatprep.subr.bf16.mxu0 0
    %106 = vmatpush2.bf16.msra.mxu0 0
    %107 = vmatprep.subr.bf16.mxu0 0
    %108 = vmatpush2.bf16.msra.mxu0 0
    %109 = vmatprep.subr.bf16.mxu0 0
    %110 = vmatpush2.bf16.msra.mxu0 0
    %111 = vmatprep.subr.bf16.mxu0 0
    %112 = vmatpush2.bf16.msra.mxu0 0
    %113 = vmatprep.subr.bf16.mxu0 0
    %114 = vmatpush2.bf16.msra.mxu0 0
    %115 = vmatprep.mubr.bf16.mxu0 0
    %116 = vmatmul.mubr.bf16.gmra.mxu0 %v81
    %v117 = vpop.f32.mrf.mxu0
    %v118 = vadd.f32 %v72, %v117
    %v119 = vpop.f32.mrf.mxu0
    %v120 = vpop.f32.mrf.mxu0
    %v121 = vpop.f32.mrf.mxu0
    %122 = vdwg.mxu0
    %vm123 = vcmp.ge.f32.partialorder %v118, 0.0
    %v124 = vmul.f32 %v118, 0.2
    %v125 = vsel %vm123, %v118, %v124
    %v126 = vpack.c.bf16 %v125, %v125
    %v127 = vld [vmem:[#allocation8] sm:$0xf]
    %v128 = vld [vmem:[#allocation8 + $0x4] sm:$0xf]
    %v129 = vld [vmem:[#allocation8 + $0x8] sm:$0xf]
    %v130 = vld [vmem:[#allocation8 + $0xc] sm:$0xf]
    %v131 = vld [vmem:[#allocation8 + $0x10] sm:$0xf]
    %v132 = vld [vmem:[#allocation8 + $0x14] sm:$0xf]
    %v133 = vld [vmem:[#allocation8 + $0x18] sm:$0xf]
    %v134 = vld [vmem:[#allocation8 + $0x1c] sm:$0xf]
    %v135 = vld [vmem:[#allocation8 + $0x20] sm:$0xf]
    %v136 = vld [vmem:[#allocation8 + $0x24] sm:$0xf]
    %v137 = vld [vmem:[#allocation8 + $0x28] sm:$0xf]
    %v138 = vld [vmem:[#allocation8 + $0x2c] sm:$0xf]
    %v139 = vld [vmem:[#allocation8 + $0x30] sm:$0xf]
    %v140 = vld [vmem:[#allocation8 + $0x34] sm:$0xf]
    %v141 = vld [vmem:[#allocation8 + $0x38] sm:$0xf]
    %v142 = vld [vmem:[#allocation8 + $0x3c] sm:$0xf]
    %v143 = vlaneseq
    %v144 = vshrl.u32 %v143, 7
    %v145 = vsub.s32 0, %v144
    %v146 = vrot.slane %v65, %v145
    %v163 = vunpack.c.l.b16 %v127
    %v164 = vunpack.c.l.b16 %v128
    %v165 = vunpack.c.l.b16 %v129
    %v166 = vunpack.c.l.b16 %v130
    %v167 = vunpack.c.l.b16 %v131
    %v168 = vunpack.c.l.b16 %v132
    %v169 = vunpack.c.l.b16 %v133
    %v170 = vunpack.c.l.b16 %v134
    %v171 = vunpack.c.l.b16 %v135
    %v172 = vunpack.c.l.b16 %v136
    %v173 = vunpack.c.l.b16 %v137
    %v174 = vunpack.c.l.b16 %v138
    %v175 = vunpack.c.l.b16 %v139
    %v176 = vunpack.c.l.b16 %v140
    %v177 = vunpack.c.l.b16 %v141
    %v178 = vunpack.c.l.b16 %v142
    %v179 = vpack.c.b16 %v164, %v163
    %v180 = vpack.c.b16 %v166, %v165
    %v181 = vpack.c.b16 %v168, %v167
    %v182 = vpack.c.b16 %v170, %v169
    %v183 = vpack.c.b16 %v172, %v171
    %v184 = vpack.c.b16 %v174, %v173
    %v185 = vpack.c.b16 %v176, %v175
    %v186 = vpack.c.b16 %v178, %v177
    %195 = vmatprep.subr.bf16.mxu0 0
    %196 = vmatpush1.bf16.msra.mxu0 %v186
    %197 = vmatprep.subr.bf16.mxu0 0
    %198 = vmatpush1.bf16.msra.mxu0 %v185
    %199 = vmatprep.subr.bf16.mxu0 0
    %200 = vmatpush1.bf16.msra.mxu0 %v184
    %201 = vmatprep.subr.bf16.mxu0 0
    %202 = vmatpush1.bf16.msra.mxu0 %v183
    %203 = vmatprep.subr.bf16.mxu0 0
    %204 = vmatpush1.bf16.msra.mxu0 %v182
    %205 = vmatprep.subr.bf16.mxu0 0
    %206 = vmatpush1.bf16.msra.mxu0 %v181
    %207 = vmatprep.subr.bf16.mxu0 0
    %208 = vmatpush1.bf16.msra.mxu0 %v180
    %209 = vmatprep.subr.bf16.mxu0 0
    %210 = vmatpush1.bf16.msra.mxu0 %v179
    %211 = vmatprep.subr.bf16.mxu0 0
    %212 = vmatpush2.bf16.msra.mxu0 0
    %213 = vmatprep.subr.bf16.mxu0 0
    %214 = vmatpush2.bf16.msra.mxu0 0
    %215 = vmatprep.subr.bf16.mxu0 0
    %216 = vmatpush2.bf16.msra.mxu0 0
    %217 = vmatprep.subr.bf16.mxu0 0
    %218 = vmatpush2.bf16.msra.mxu0 0
    %219 = vmatprep.subr.bf16.mxu0 0
    %220 = vmatpush2.bf16.msra.mxu0 0
    %221 = vmatprep.subr.bf16.mxu0 0
    %222 = vmatpush2.bf16.msra.mxu0 0
    %223 = vmatprep.subr.bf16.mxu0 0
    %224 = vmatpush2.bf16.msra.mxu0 0
    %225 = vmatprep.subr.bf16.mxu0 0
    %226 = vmatpush2.bf16.msra.mxu0 0
    %227 = vmatprep.mubr.bf16.mxu0 0
    %228 = vmatmul.mubr.bf16.gmra.mxu0 %v126
    %v229 = vpop.f32.mrf.mxu0
    %v230 = vadd.f32 %v146, %v229
    %v231 = vpop.f32.mrf.mxu0
    %v232 = vpop.f32.mrf.mxu0
    %v233 = vpop.f32.mrf.mxu0
    %234 = vdwg.mxu0
    %vm235 = vcmp.ge.f32.partialorder %v230, 0.0
    %v236 = vmul.f32 %v230, 0.2
    %v237 = vsel %vm235, %v230, %v236
    %s238 = sld [smem:[#allocation2]]
    %v239 = vstv %s238
    %240 = vmatprep.subr.mxu0 0.0
    %241 = vmatpush1.xpose.msra.mxu0 0.0
    %242 = vmatprep.subr.mxu0 0.0
    %243 = vmatpush1.xpose.msra.mxu0 0.0
    %244 = vmatprep.subr.mxu0 0.0
    %245 = vmatpush1.xpose.msra.mxu0 0.0
    %246 = vmatprep.subr.mxu0 0.0
    %247 = vmatpush1.xpose.msra.mxu0 0.0
    %248 = vmatprep.subr.mxu0 0.0
    %249 = vmatpush1.xpose.msra.mxu0 0.0
    %250 = vmatprep.subr.mxu0 0.0
    %251 = vmatpush1.xpose.msra.mxu0 0.0
    %252 = vmatprep.subr.mxu0 0.0
    %253 = vmatpush1.xpose.msra.mxu0 0.0
    %254 = vmatprep.subr.mxu0 0.0
    %255 = vmatpush1.xpose.msra.mxu0 0.0
    %256 = vmatprep.subr.mxu0 0.0
    %257 = vmatpush1.xpose.msra.mxu0 0.0
    %258 = vmatprep.subr.mxu0 0.0
    %259 = vmatpush1.xpose.msra.mxu0 0.0
    %260 = vmatprep.subr.mxu0 0.0
    %261 = vmatpush1.xpose.msra.mxu0 0.0
    %262 = vmatprep.subr.mxu0 0.0
    %263 = vmatpush1.xpose.msra.mxu0 0.0
    %264 = vmatprep.subr.mxu0 0.0
    %265 = vmatpush1.xpose.msra.mxu0 0.0
    %266 = vmatprep.subr.mxu0 0.0
    %267 = vmatpush1.xpose.msra.mxu0 0.0
    %268 = vmatprep.subr.mxu0 0.0
    %269 = vmatpush1.xpose.msra.mxu0 0.0
    %270 = vmatprep.subr.mxu0 0.0
    %271 = vmatpush1.xpose.msra.mxu0 %v237
    %272 = vmatprep.subr.mxu0 0.0
    %273 = vmatpush2.xpose.msra.mxu0 0.0
    %274 = vmatprep.subr.mxu0 0.0
    %275 = vmatpush2.xpose.msra.mxu0 0.0
    %276 = vmatprep.subr.mxu0 0.0
    %277 = vmatpush2.xpose.msra.mxu0 0.0
    %278 = vmatprep.subr.mxu0 0.0
    %279 = vmatpush2.xpose.msra.mxu0 0.0
    %280 = vmatprep.subr.mxu0 0.0
    %281 = vmatpush2.xpose.msra.mxu0 0.0
    %282 = vmatprep.subr.mxu0 0.0
    %283 = vmatpush2.xpose.msra.mxu0 0.0
    %284 = vmatprep.subr.mxu0 0.0
    %285 = vmatpush2.xpose.msra.mxu0 0.0
    %286 = vmatprep.subr.mxu0 0.0
    %287 = vmatpush2.xpose.msra.mxu0 0.0
    %288 = vmatprep.subr.mxu0 0.0
    %289 = vmatpush2.xpose.msra.mxu0 0.0
    %290 = vmatprep.subr.mxu0 0.0
    %291 = vmatpush2.xpose.msra.mxu0 0.0
    %292 = vmatprep.subr.mxu0 0.0
    %293 = vmatpush2.xpose.msra.mxu0 0.0
    %294 = vmatprep.subr.mxu0 0.0
    %295 = vmatpush2.xpose.msra.mxu0 0.0
    %296 = vmatprep.subr.mxu0 0.0
    %297 = vmatpush2.xpose.msra.mxu0 0.0
    %298 = vmatprep.subr.mxu0 0.0
    %299 = vmatpush2.xpose.msra.mxu0 0.0
    %300 = vmatprep.subr.mxu0 0.0
    %301 = vmatpush2.xpose.msra.mxu0 0.0
    %302 = vmatprep.subr.mxu0 0.0
    %303 = vmatpush2.xpose.msra.mxu0 0.0
    %304 = vmatprep.mubr.f32.mxu0 0.0
    %305 = vmatmul.mubr.f32.gmra.mxu0 %v66
    %v306 = vpop.f32.mrf.mxu0
    %v307 = vadd.f32 %v239, %v306
    %v308 = vpop.f32.mrf.mxu0
    %309 = vdwg.mxu0
    %vm310 = vcmask 57344
    %311 = vst.msk [vmem:[#allocation9] sm:$0x1] %vm310, %v307
    // Predicated region
    $region34: #{tpu_custom_call.1} parent=1 // pred_check
      _
    $region35: #{tpu_custom_call.1} parent=1 // pred_check_branch
      %313 = sbr.rel (0) target = $region37
    $region36: #{tpu_custom_call.1} parent=1 // pred_region
      %s315 = ssub.s32 16, 16
      %316 = vsyncadd [#allocation5], %s315
      %s318 = sshll.u32 [#allocation9], 4
      %s319 = int_to_ptr.vmem [resolvable:$true] %s318
      %321 = dma.vmem_to_hbm [thread:$0]  %s319, 16, %s5, [#allocation5]
    $region37: #{tpu_custom_call.1} parent=1 // pred_fallthru
      _
    // Predicated region
    $region38: #{tpu_custom_call.1} parent=1 // pred_check
      _
    $region39: #{tpu_custom_call.1} parent=1 // pred_check_branch
      %323 = sbr.rel (0) target = $region41
    $region40: #{tpu_custom_call.1} parent=1 // pred_region
      %324 = dma.done [#allocation5], 16
    $region41: #{tpu_custom_call.1} parent=1 // pred_fallthru
      _
    %325 = vsyncpa [#allocation4], 1
    %326 = vsyncpa [#allocation7], 1
    %327 = vsyncpa [#allocation5], 1

</llo_original>
